<compile_context>
chip_gen: v5e
topology: v5e:2x2
jax: 0.10.0
libtpu: 0.0.40
codegen_flags: <defaults>
</compile_context>

<pallas_src>
import functools

import jax
import jax.numpy as jnp
from jax.experimental import pallas as pl
from jax.experimental.pallas import tpu as pltpu


def _dfp_loss_kernel(labels_ref, dist_ref, within_ref, between_ref, *,
                     batch_size, tile_rows, masked, compute_native):
    i = pl.program_id(0)

    d = dist_ref[...]                                       # native dtype DMA
    x = d if compute_native else d.astype(jnp.float32)      # (TB, C)
    labels = labels_ref[...]                                 # (TB, 1) int32
    tb, c = x.shape

    # Fused one-hot select: mask*dist -> where(label==class, dist, 0).
    classes = jax.lax.broadcasted_iota(jnp.int32, (tb, c), 1)
    zero = jnp.zeros((), x.dtype)
    sel = jnp.where(labels == classes, x, zero)
    # One non-zero per row -> exact even in bf16.
    dist_within = jnp.sum(sel, axis=1, keepdims=True)        # (TB, 1)

    # relu(dist_within - dist), elementwise in native dtype.
    diff = jnp.maximum(dist_within - x, zero)                # (TB, C)

    # Promote only at the reductions; accumulate in f32.
    row_within = dist_within.astype(jnp.float32)             # (TB, 1)
    row_between = jnp.sum(diff.astype(jnp.float32), axis=1, keepdims=True)

    if masked:
        # Partial last tile: zero invalid rows via a select on the per-row
        # results (NaN-safe; ~C x cheaper than masking the (TB,C) tile).
        rows = i * tile_rows + jax.lax.broadcasted_iota(jnp.int32, (tb, 1), 0)
        valid = rows < batch_size
        row_within = jnp.where(valid, row_within, 0.0)
        row_between = jnp.where(valid, row_between, 0.0)

    # Per-tile partial sums, written as lane-dense (8,128) slabs so the batch
    # axis can be "parallel" (both v7x TensorCores) with no carried state.
    within_ref[...] = jnp.broadcast_to(jnp.sum(row_within), (8, 128))
    between_ref[...] = jnp.broadcast_to(jnp.sum(row_between), (8, 128))


def _round_up(x, m):
    return (x + m - 1) // m * m


def _vmem_capacity_bytes():
    try:
        return int(pltpu.get_tpu_info().vmem_capacity_bytes)
    except Exception:  # conservative fallback == v7x's 64 MiB
        return 64 * 1024 * 1024


def _pick_tile_rows(batch, num_classes, itemsize, buffer_budget_bytes):
    """Pick the batch-tile height from a VMEM byte budget.

    Lane-padded VMEM accounting:
      dist row   : round_up(C, 128) * itemsize   (last dim pads to 128 lanes)
      labels row : 128 * 4                       ((TB,1) int32 pads to (TB,128))
    Each input is double-buffered by the pipeline; each dist buffer is also
    capped at ~8 MiB (past that, per-step DMA gains are negligible).
    """
    dist_row = _round_up(num_classes, 128) * itemsize
    label_row = 128 * 4
    tb_budget = buffer_budget_bytes // (2 * (dist_row + label_row))
    tb_target = (8 * 1024 * 1024) // dist_row
    tb = min(tb_budget, tb_target)
    tb = max(16, (tb // 16) * 16)       # sublane alignment (incl. bf16 packing)
    if batch <= tb:
        return int(batch)               # single full-extent tile
    return int(tb)


def dfp_loss(dist, labels, beta=1.0, tile_rows=None):
    """Pallas implementation of DFPLoss.forward.

    Args:
      dist:      (batch, num_classes) distances (any float dtype; DMA'd in its
                 native dtype, reductions accumulated in f32).
      labels:    (batch,) integer class labels.
      beta:      scalar weight on the between-class term.
      tile_rows: optional override of the batch tile height.

    Returns:
      dict with scalar 'total', 'within', 'between' (float32).
    """
    B, C = dist.shape
    labels2d = labels.astype(jnp.int32).reshape(B, 1)
    itemsize = jnp.dtype(dist.dtype).itemsize

    # Generation-aware VMEM budgets.
    vmem_cap = _vmem_capacity_bytes()
    if vmem_cap >= 100 * 1024 * 1024:        # v5e / v6e: 128 MiB physical VMEM
        buffer_budget = 48 * 1024 * 1024
        vmem_limit = 96 * 1024 * 1024
    else:                                    # v7x: 64 MiB physical VMEM
        buffer_budget = 24 * 1024 * 1024
        vmem_limit = 40 * 1024 * 1024

    if tile_rows is None:
        tile_rows = _pick_tile_rows(B, C, itemsize, buffer_budget)
    tb = int(tile_rows)
    n_tiles = pl.cdiv(B, tb)

    # bf16 elementwise path (packed 2/lane on v6e/v7x); f32 otherwise.
    compute_native = dist.dtype == jnp.bfloat16

    kernel = functools.partial(
        _dfp_loss_kernel,
        batch_size=B, tile_rows=tb, masked=(B % tb != 0),
        compute_native=compute_native)

    cost = pl.CostEstimate(
        flops=5 * B * C,
        transcendentals=0,
        bytes_accessed=B * C * itemsize + B * 4 + 2 * n_tiles * 8 * 128 * 4)

    within_parts, between_parts = pl.pallas_call(
        kernel,
        out_shape=(
            jax.ShapeDtypeStruct((8 * n_tiles, 128), jnp.float32),
            jax.ShapeDtypeStruct((8 * n_tiles, 128), jnp.float32),
        ),
        grid_spec=pltpu.PrefetchScalarGridSpec(
            num_scalar_prefetch=0,
            grid=(n_tiles,),
            in_specs=[
                pl.BlockSpec((tb, 1), lambda i: (i, 0)),    # labels (TB, 1)
                pl.BlockSpec((tb, C), lambda i: (i, 0)),    # dist   (TB, C)
            ],
            out_specs=[
                pl.BlockSpec((8, 128), lambda i: (i, 0)),   # per-tile partials
                pl.BlockSpec((8, 128), lambda i: (i, 0)),
            ],
        ),
        compiler_params=pltpu.CompilerParams(
            dimension_semantics=("parallel",),              # no carried state
            vmem_limit_bytes=vmem_limit),
        cost_estimate=cost,
    )(labels2d, dist)

    # Tiny final reduction + normalisation (incl. /(C-1), /B, *beta) in JAX.
    within_sum = jnp.sum(within_parts[0::8, 0])
    between_sum = jnp.sum(between_parts[0::8, 0])
    loss_within = within_sum * (1.0 / B)
    loss_between = between_sum * (beta / (B * (C - 1.0)))
    return {
        "total": loss_within + loss_between,
        "within": loss_within,
        "between": loss_between,
    }


def _dfp_loss_ref(dist, labels, beta=1.0):
    """Pure-JAX reference matching the PyTorch module (f32 compute)."""
    dist = dist.astype(jnp.float32)
    B, C = dist.shape
    mask = (labels[:, None] == jnp.arange(C)[None, :]).astype(dist.dtype)
    dist_within = jnp.sum(dist * mask, axis=1, keepdims=True)
    dist_between = jnp.sum(jnp.maximum(dist_within - dist, 0.0), axis=1) / (C - 1.0)
    loss_within = jnp.sum(dist_within) / B
    loss_between = beta * jnp.sum(dist_between) / B
    return {
        "total": loss_within + loss_between,
        "within": loss_within,
        "between": loss_between,
    }


if __name__ == "__main__":
    key = jax.random.PRNGKey(0)
    k1, k2, k3, k4 = jax.random.split(key, 4)

    # --- Small f32 case (single tile, matches original module spec) -------
    B1, C1, beta1 = 8, 16, 1.0
    dist1 = jax.random.uniform(k1, (B1, C1), dtype=jnp.float32)
    labels1 = jax.random.randint(k2, (B1,), 0, C1, dtype=jnp.int32)

    out1 = dfp_loss(dist1, labels1, beta=beta1)
    jax.block_until_ready(out1)
    ref1 = _dfp_loss_ref(dist1, labels1, beta=beta1)
    for name in ("total", "within", "between"):
        assert jnp.allclose(out1[name], ref1[name], rtol=1e-5, atol=1e-5), (
            name, out1[name], ref1[name])

    # --- bf16 case: several tiles, partial last tile, bf16 elementwise ----
    B2, C2, beta2 = 300, 256, 0.5
    dist2 = jax.random.uniform(k3, (B2, C2), dtype=jnp.bfloat16)
    labels2 = jax.random.randint(k4, (B2,), 0, C2, dtype=jnp.int32)

    out2 = dfp_loss(dist2, labels2, beta=beta2, tile_rows=128)
    jax.block_until_ready(out2)
    ref2 = _dfp_loss_ref(dist2, labels2, beta=beta2)
    for name in ("total", "within", "between"):
        # bf16 elementwise subtract adds <= ~2^-9 relative error vs the f32 ref.
        assert jnp.allclose(out2[name], ref2[name], rtol=5e-3, atol=5e-3), (
            name, out2[name], ref2[name])

    print("KERNEL_OK")
</pallas_src>

<mosaic_0001>
module attributes {stable_mosaic.version = 11 : i64} {
  func.func @_dfp_loss_kernel(%arg0: i32, %arg1: memref<8x1xi32, #tpu.memory_space<vmem>>, %arg2: memref<8x16xf32, #tpu.memory_space<vmem>>, %arg3: memref<8x128xf32, #tpu.memory_space<vmem>>, %arg4: memref<8x128xf32, #tpu.memory_space<vmem>>) attributes {dimension_semantics = [#tpu.dimension_semantics<parallel>], iteration_bounds = array<i64: 1>, scalar_prefetch = 0 : i64, scratch_operands = 0 : i64, tpu.core_type = #tpu.core_type<tc>, window_params = [{transform_indices = @transform_0, window_bounds = array<i64: 8, 1>}, {transform_indices = @transform_1, window_bounds = array<i64: 8, 16>}, {transform_indices = @transform_2, window_bounds = array<i64: 8, 128>}, {transform_indices = @transform_3, window_bounds = array<i64: 8, 128>}]} {
    %c0 = arith.constant 0 : index
    %c0_0 = arith.constant 0 : index
    %0 = vector.load %arg2[%c0, %c0_0] : memref<8x16xf32, #tpu.memory_space<vmem>>, vector<8x16xf32>
    %c0_1 = arith.constant 0 : index
    %c0_2 = arith.constant 0 : index
    %1 = vector.load %arg1[%c0_1, %c0_2] : memref<8x1xi32, #tpu.memory_space<vmem>>, vector<8x1xi32>
    %2 = tpu.iota {dimensions = array<i32: 1>} : vector<8x16xi32>
    %3 = vector.broadcast %1 : vector<8x1xi32> to vector<8x16xi32>
    %4 = arith.cmpi eq, %3, %2 : vector<8x16xi32>
    %cst = arith.constant 0.000000e+00 : f32
    %5 = vector.broadcast %cst : f32 to vector<8x16xf32>
    %6 = arith.select %4, %0, %5 : vector<8x16xi1>, vector<8x16xf32>
    %cst_3 = arith.constant dense<0.000000e+00> : vector<8xf32>
    %7 = vector.multi_reduction <add>, %6, %cst_3 [1] : vector<8x16xf32> to vector<8xf32>
    %8 = vector.shape_cast %7 : vector<8xf32> to vector<8x1xf32>
    %9 = vector.broadcast %8 : vector<8x1xf32> to vector<8x16xf32>
    %10 = arith.subf %9, %0 : vector<8x16xf32>
    %cst_4 = arith.constant 0.000000e+00 : f32
    %11 = vector.broadcast %cst_4 : f32 to vector<8x16xf32>
    %12 = arith.maximumf %10, %11 : vector<8x16xf32>
    %cst_5 = arith.constant dense<0.000000e+00> : vector<8xf32>
    %13 = vector.multi_reduction <add>, %12, %cst_5 [1] : vector<8x16xf32> to vector<8xf32>
    %14 = vector.shape_cast %13 : vector<8xf32> to vector<8x1xf32>
    %15 = vector.shape_cast %8 : vector<8x1xf32> to vector<1x8x1xf32>
    %cst_6 = arith.constant dense<0.000000e+00> : vector<1xf32>
    %16 = vector.multi_reduction <add>, %15, %cst_6 [1, 2] : vector<1x8x1xf32> to vector<1xf32>
    %17 = vector.shape_cast %16 : vector<1xf32> to vector<1x1x1xf32>
    %18 = vector.extract %17[0, 0, 0] : f32 from vector<1x1x1xf32>
    %19 = vector.broadcast %18 : f32 to vector<8x128xf32>
    %c0_7 = arith.constant 0 : index
    %c0_8 = arith.constant 0 : index
    %20 = vector.load %arg3[%c0_7, %c0_8] : memref<8x128xf32, #tpu.memory_space<vmem>>, vector<8x128xf32>
    tpu.vector_store %arg3[%c0_7, %c0_8], %19 {strides = array<i32>} : memref<8x128xf32, #tpu.memory_space<vmem>>, vector<8x128xf32>,
    %21 = vector.shape_cast %14 : vector<8x1xf32> to vector<1x8x1xf32>
    %cst_9 = arith.constant dense<0.000000e+00> : vector<1xf32>
    %22 = vector.multi_reduction <add>, %21, %cst_9 [1, 2] : vector<1x8x1xf32> to vector<1xf32>
    %23 = vector.shape_cast %22 : vector<1xf32> to vector<1x1x1xf32>
    %24 = vector.extract %23[0, 0, 0] : f32 from vector<1x1x1xf32>
    %25 = vector.broadcast %24 : f32 to vector<8x128xf32>
    %c0_10 = arith.constant 0 : index
    %c0_11 = arith.constant 0 : index
    %26 = vector.load %arg4[%c0_10, %c0_11] : memref<8x128xf32, #tpu.memory_space<vmem>>, vector<8x128xf32>
    tpu.vector_store %arg4[%c0_10, %c0_11], %25 {strides = array<i32>} : memref<8x128xf32, #tpu.memory_space<vmem>>, vector<8x128xf32>,
    return
  }
  func.func @transform_0(%arg0: i32) -> (i32, i32) {
    %c0_i32 = arith.constant 0 : i32
    %c0_i32_0 = arith.constant 0 : i32
    return %arg0, %c0_i32 : i32, i32
  }
  func.func @transform_1(%arg0: i32) -> (i32, i32) {
    %c0_i32 = arith.constant 0 : i32
    %c0_i32_0 = arith.constant 0 : i32
    return %arg0, %c0_i32 : i32, i32
  }
  func.func @transform_2(%arg0: i32) -> (i32, i32) {
    %c0_i32 = arith.constant 0 : i32
    %c0_i32_0 = arith.constant 0 : i32
    return %arg0, %c0_i32 : i32, i32
  }
  func.func @transform_3(%arg0: i32) -> (i32, i32) {
    %c0_i32 = arith.constant 0 : i32
    %c0_i32_0 = arith.constant 0 : i32
    return %arg0, %c0_i32 : i32, i32
  }
}

</mosaic_0001>

<llo_original>
// kernel: tpu_custom_call.1
$region0: #{tpu_custom_call.1}
  #allocation0 [shape = 'u32[]', space=smem, size = 0x4, offset = 0x4, fixed_abs, tag = 'smem constant byte address 0x4 - core index']
  #allocation1 [shape = 'u32[72,128]{1,0:T(1,128)}', space=vmem, size = 0x9000, scoped, tag = 'internal scratch']
  %s0 = inlined_call_operand.vmem [shape: s32[8,1], index: 0, kind: input, shape index: {}]
  %s1 = inlined_call_operand.vmem [shape: f32[8,16], index: 1, kind: input, shape index: {}]
  %s2 = inlined_call_operand.hbm [shape: f32[8,128], index: 2, kind: output, shape index: {0}]
  %s3 = inlined_call_operand.hbm [shape: f32[8,128], index: 3, kind: output, shape index: {1}]
  %4 = xla_tuple %s2, %s3
  %s5 = sld [smem:[#allocation0]]
  $region26: #{tpu_custom_call.1} parent=0
    _
  %s7 = ssub.s32 1, %s5
  %s8 = scalar_select 0, %s7, %s5
  $region1: #{tpu_custom_call.1} parent=0
    #allocation2 [shape = 'u8[4096]{0}', space=vmem, size = 0x1000, scoped, tag = 'output window, operand 0, single buffered']
    #allocation3 [shape = 's32[1]{0}', space=sflag, size = 0x4, scoped, tag = 'scoped memory for tpu_custom_call.1']
    #allocation4 [shape = 'u8[4096]{0}', space=vmem, size = 0x1000, scoped, tag = 'output window, operand 1, single buffered']
    #allocation5 [shape = 's32[1]{0}', space=sflag, size = 0x4, scoped, tag = 'scoped memory for tpu_custom_call.1']
    %9 = vsyncpa [#allocation3], 0
    %10 = vsyncpa [#allocation5], 0
    // Predicated region
    $region2: #{tpu_custom_call.1} parent=1 // pred_check
      _
    $region3: #{tpu_custom_call.1} parent=1 // pred_check_branch
      %12 = sbr.rel (0) target = $region5
    $region4: #{tpu_custom_call.1} parent=1 // pred_region
      _
    $region5: #{tpu_custom_call.1} parent=1 // pred_fallthru
      _
    // Predicated region
    $region6: #{tpu_custom_call.1} parent=1 // pred_check
      _
    $region7: #{tpu_custom_call.1} parent=1 // pred_check_branch
      %14 = sbr.rel (0) target = $region9
    $region8: #{tpu_custom_call.1} parent=1 // pred_region
      _
    $region9: #{tpu_custom_call.1} parent=1 // pred_fallthru
      _
    %v15 = vld [vmem:[%s1] sm:$0xff]
    %v16 = vld [vmem:[%s0] sm:$0xff]
    %v17 = vlaneseq
    %v18 = vand.u32 %v17, 127
    %19 = vset.pattern.permute.xlu0 0
    %20 = vperm.xlu0 %19, %v16
    %v21 = vpop.permute.xlu0 %20
    %vm22 = vcmp.eq.s32.totalorder %v21, %v18
    %v23 = vsel %vm22, %v15, 0.0
    %vm24 = vcmask 130048
    %v25 = vsel %vm24, %v23, 0.0
    %26 = vadd.xlane.f32.xlu0 %v25
    %v27 = vpop.xlane.xlu0 %26
    %v28 = vsub.f32 %v27, %v15
    %v29 = vmax.f32 %v28, 0.0
    %v30 = vsel %vm24, %v29, 0.0
    %31 = vadd.xlane.f32.xlu0 %v30
    %v32 = vpop.xlane.xlu0 %31
    %vm33 = vcmask 7168
    %v34 = vsel %vm33, %v27, 0.0
    %35 = vadd.xlane.f32.xlu0 %v34
    %v36 = vpop.xlane.xlu0 %35
    %v37 = vrot.slane %v36, 4
    %v38 = vadd.f32 %v36, %v37
    %v39 = vrot.slane %v38, 2
    %v40 = vadd.f32 %v38, %v39
    %v41 = vrot.slane %v40, 1
    %v42 = vadd.f32 %v40, %v41
    %s43 = vtos %v42
    %v44 = vstv %s43
    %45 = vst [vmem:[#allocation2] sm:$0xff] %v44
    %v46 = vsel %vm33, %v32, 0.0
    %47 = vadd.xlane.f32.xlu0 %v46
    %v48 = vpop.xlane.xlu0 %47
    %v49 = vrot.slane %v48, 4
    %v50 = vadd.f32 %v48, %v49
    %v51 = vrot.slane %v50, 2
    %v52 = vadd.f32 %v50, %v51
    %v53 = vrot.slane %v52, 1
    %v54 = vadd.f32 %v52, %v53
    %s55 = vtos %v54
    %v56 = vstv %s55
    %57 = vst [vmem:[#allocation4] sm:$0xff] %v56
    // Predicated region
    $region10: #{tpu_custom_call.1} parent=1 // pred_check
      _
    $region11: #{tpu_custom_call.1} parent=1 // pred_check_branch
      %59 = sbr.rel (0) target = $region13
    $region12: #{tpu_custom_call.1} parent=1 // pred_region
      %61 = vsyncadd [#allocation3], 0
      %s63 = sshll.u32 [#allocation2], 4
      %s64 = int_to_ptr.vmem [resolvable:$true] %s63
      %s65 = sshll.u32 %s2, 4
      %s66 = int_to_ptr.hbm [resolvable:$true] %s65
      %68 = dma.vmem_to_hbm [thread:$0]  %s64, 128, %s66, [#allocation3]
    $region13: #{tpu_custom_call.1} parent=1 // pred_fallthru
      _
    // Predicated region
    $region14: #{tpu_custom_call.1} parent=1 // pred_check
      _
    $region15: #{tpu_custom_call.1} parent=1 // pred_check_branch
      %70 = sbr.rel (0) target = $region17
    $region16: #{tpu_custom_call.1} parent=1 // pred_region
      %72 = vsyncadd [#allocation5], 0
      %s74 = sshll.u32 [#allocation4], 4
      %s75 = int_to_ptr.vmem [resolvable:$true] %s74
      %s76 = sshll.u32 %s3, 4
      %s77 = int_to_ptr.hbm [resolvable:$true] %s76
      %79 = dma.vmem_to_hbm [thread:$0]  %s75, 128, %s77, [#allocation5]
    $region17: #{tpu_custom_call.1} parent=1 // pred_fallthru
      _
    // Predicated region
    $region18: #{tpu_custom_call.1} parent=1 // pred_check
      _
    $region19: #{tpu_custom_call.1} parent=1 // pred_check_branch
      %81 = sbr.rel (0) target = $region21
    $region20: #{tpu_custom_call.1} parent=1 // pred_region
      %83 = dma.done [#allocation3], 128
    $region21: #{tpu_custom_call.1} parent=1 // pred_fallthru
      _
    // Predicated region
    $region22: #{tpu_custom_call.1} parent=1 // pred_check
      _
    $region23: #{tpu_custom_call.1} parent=1 // pred_check_branch
      %85 = sbr.rel (0) target = $region25
    $region24: #{tpu_custom_call.1} parent=1 // pred_region
      %87 = dma.done [#allocation5], 128
    $region25: #{tpu_custom_call.1} parent=1 // pred_fallthru
      _
    %88 = vsyncpa [#allocation3], 1
    %89 = vsyncpa [#allocation5], 1

</llo_original>
